<compile_context>
chip_gen: v7x
topology: tpu7x:2x2x1
jax: 0.10.0
libtpu: 0.0.40
codegen_flags: <defaults>
</compile_context>

<pallas_src>
import math

import jax
import jax.numpy as jnp
from jax.experimental import pallas as pl
from jax.experimental.pallas import tpu as pltpu

LN_EPS = 1e-5  # torch.nn.LayerNorm default


def _round_up(x, m):
    return ((x + m - 1) // m) * m


def _tile_plan(rows, d, dout, x_itemsize, out_itemsize, w_itemsize, tm=None,
               *, max_tm=1024, min_tiles=4, vmem_budget_bytes=24 << 20):
    """Pick the row tile and an explicit scoped-VMEM limit.

    Per grid step we hold (bytes):
      x tile (double-buffered)   : 2 * tm * d * x_itemsize
      out tile (double-buffered) : 2 * tm * dout * out_itemsize
      f32 temporaries            : ~ tm * (2*d + dout) * 4
      resident W + bias (2x for the default pipeliner, constant index map)
    """
    per_row = 2 * d * x_itemsize + 2 * dout * out_itemsize + (2 * d + dout) * 4
    resident = 2 * (d * dout * w_itemsize + dout * 4)
    if tm is None:
        budget = max(vmem_budget_bytes - resident, 1 << 20)
        tm = min(max_tm, max(8, budget // per_row))
    tm = max(8, (int(tm) // 8) * 8)  # sublane multiple
    # Enough grid steps to feed both v7x TensorCores (neutral on 1-TC chips).
    tm = max(8, min(tm, _round_up(pl.cdiv(rows, min_tiles), 8)))
    vmem_needed = tm * per_row + resident
    vmem_limit = int(min(48 << 20,
                         max(32 << 20, vmem_needed + (vmem_needed >> 2) + (2 << 20))))
    return tm, vmem_limit


def prenorm_linear_kernel(x_ref, w_ref, b_ref, o_ref):
    # --- LayerNorm over the last axis: two-pass (centered) f32 statistics ---
    x = x_ref[...].astype(jnp.float32)                     # (tm, D)
    mean = jnp.mean(x, axis=-1, keepdims=True)
    xc = x - mean
    var = jnp.mean(xc * xc, axis=-1, keepdims=True)
    y = xc * jax.lax.rsqrt(var + LN_EPS)                   # gamma/beta folded into W/b

    # --- fn = Linear(dim, dim): MXU matmul, f32 accumulate, bias folded in ---
    out = jnp.dot(y.astype(w_ref.dtype), w_ref[...],
                  preferred_element_type=jnp.float32) + b_ref[...]
    o_ref[...] = out.astype(o_ref.dtype)


def prenorm_forward(x, gamma, beta, w, w_bias, *, tm=None, out_dtype=None,
                    mxu_dtype=jnp.bfloat16):
    """PreNorm(dim, Linear(dim, dim)) forward.

    x: (..., D); gamma/beta: (D,); w: (D, Dout); w_bias: (Dout,).
    """
    lead = x.shape[:-1]
    D = x.shape[-1]
    Dout = w.shape[-1]
    rows = math.prod(lead) if lead else 1
    out_dtype = x.dtype if out_dtype is None else jnp.dtype(out_dtype)

    # Fold the LayerNorm affine into the projection (exact in f32, then a
    # single cast of the weight to the MXU operand dtype).
    g32 = gamma.astype(jnp.float32)
    b32 = beta.astype(jnp.float32)
    w32 = w.astype(jnp.float32)
    w_eff = (w32 * g32[:, None]).astype(mxu_dtype)                     # (D, Dout)
    b_eff = (w_bias.astype(jnp.float32) + b32 @ w32).reshape(1, Dout)  # f32

    xf = x.reshape(rows, D)  # metadata-only reshape, no extra HBM pass

    tm, vmem_limit = _tile_plan(
        rows, D, Dout,
        x_itemsize=x.dtype.itemsize,
        out_itemsize=out_dtype.itemsize,
        w_itemsize=jnp.dtype(mxu_dtype).itemsize,
        tm=tm)
    num_tiles = pl.cdiv(rows, tm)

    cost = pl.CostEstimate(
        flops=2 * rows * D * Dout,
        transcendentals=rows,  # one rsqrt per row
        bytes_accessed=(rows * D * x.dtype.itemsize
                        + D * Dout * jnp.dtype(mxu_dtype).itemsize
                        + Dout * 4
                        + rows * Dout * out_dtype.itemsize),
    )

    out = pl.pallas_call(
        prenorm_linear_kernel,
        out_shape=jax.ShapeDtypeStruct((rows, Dout), out_dtype),
        grid=(num_tiles,),
        in_specs=[
            # Row tile of x; last dim = full array dim (no padding needed).
            pl.BlockSpec((tm, D), lambda i: (i, 0)),
            # Resident projection weight (gamma folded in) and bias: constant
            # index map -> fetched once and kept in VMEM across the grid.
            pl.BlockSpec((D, Dout), lambda i: (0, 0)),
            pl.BlockSpec((1, Dout), lambda i: (0, 0)),
        ],
        out_specs=pl.BlockSpec((tm, Dout), lambda i: (i, 0)),
        compiler_params=pltpu.CompilerParams(
            dimension_semantics=("parallel",),
            vmem_limit_bytes=vmem_limit,
        ),
        cost_estimate=cost,
    )(xf, w_eff, b_eff)

    return out.reshape(*lead, Dout)


def _reference(x, gamma, beta, w, w_bias):
    xf = x.astype(jnp.float32)
    mean = jnp.mean(xf, axis=-1, keepdims=True)
    var = jnp.mean((xf - mean) ** 2, axis=-1, keepdims=True)
    y = (xf - mean) / jnp.sqrt(var + LN_EPS) * gamma + beta
    return (y @ w.astype(jnp.float32) + w_bias).astype(x.dtype)


if __name__ == "__main__":
    B, N, D = 2, 8, 32  # batch=2, seq=8, hidden dim=32

    key = jax.random.PRNGKey(0)
    kx, kw, kb, kg, kbe = jax.random.split(key, 5)

    x = jax.random.normal(kx, (B, N, D), dtype=jnp.float32)

    # Non-trivial LayerNorm affine to exercise the gamma/beta folding.
    gamma = 1.0 + 0.1 * jax.random.normal(kg, (D,), dtype=jnp.float32)
    beta = 0.1 * jax.random.normal(kbe, (D,), dtype=jnp.float32)
    # fn = Linear(D, D), synthetic deterministic weights.
    w = jax.random.normal(kw, (D, D), dtype=jnp.float32) * 0.02
    w_bias = jax.random.normal(kb, (D,), dtype=jnp.float32) * 0.01

    out = prenorm_forward(x, gamma, beta, w, w_bias)
    out = jax.block_until_ready(out)

    ref = _reference(x, gamma, beta, w, w_bias)
    assert out.shape == (B, N, D)
    # bf16 MXU operands -> slightly looser tolerance than a pure-f32 matmul.
    assert jnp.allclose(out, ref, atol=2e-2, rtol=2e-2), \
        float(jnp.max(jnp.abs(out - ref)))

    print("KERNEL_OK")
</pallas_src>

<mosaic_0001>
module attributes {stable_mosaic.version = 11 : i64} {
  func.func @prenorm_linear_kernel(%arg0: i32, %arg1: memref<8x32xf32, #tpu.memory_space<vmem>>, %arg2: memref<32x32xbf16, #tpu.memory_space<vmem>>, %arg3: memref<1x32xf32, #tpu.memory_space<vmem>>, %arg4: memref<8x32xf32, #tpu.memory_space<vmem>>) attributes {dimension_semantics = [#tpu.dimension_semantics<parallel>], iteration_bounds = array<i64: 2>, scalar_prefetch = 0 : i64, scratch_operands = 0 : i64, tpu.core_type = #tpu.core_type<tc>, window_params = [{transform_indices = @transform_0, window_bounds = array<i64: 8, 32>}, {pipeline_mode = #tpu.pipeline_mode<synchronous>, transform_indices = @transform_1, window_bounds = array<i64: 32, 32>}, {pipeline_mode = #tpu.pipeline_mode<synchronous>, transform_indices = @transform_2, window_bounds = array<i64: 1, 32>}, {transform_indices = @transform_3, window_bounds = array<i64: 8, 32>}]} {
    %c0 = arith.constant 0 : index
    %c0_0 = arith.constant 0 : index
    %0 = vector.load %arg1[%c0, %c0_0] : memref<8x32xf32, #tpu.memory_space<vmem>>, vector<8x32xf32>
    %cst = arith.constant dense<0.000000e+00> : vector<8xf32>
    %1 = vector.multi_reduction <add>, %0, %cst [1] : vector<8x32xf32> to vector<8xf32>
    %2 = vector.shape_cast %1 : vector<8xf32> to vector<8x1xf32>
    %cst_1 = arith.constant 3.200000e+01 : f32
    %3 = vector.broadcast %cst_1 : f32 to vector<8x1xf32>
    %4 = arith.divf %2, %3 : vector<8x1xf32>
    %5 = vector.broadcast %4 : vector<8x1xf32> to vector<8x32xf32>
    %6 = arith.subf %0, %5 : vector<8x32xf32>
    %7 = arith.mulf %6, %6 : vector<8x32xf32>
    %cst_2 = arith.constant dense<0.000000e+00> : vector<8xf32>
    %8 = vector.multi_reduction <add>, %7, %cst_2 [1] : vector<8x32xf32> to vector<8xf32>
    %9 = vector.shape_cast %8 : vector<8xf32> to vector<8x1xf32>
    %cst_3 = arith.constant 3.200000e+01 : f32
    %10 = vector.broadcast %cst_3 : f32 to vector<8x1xf32>
    %11 = arith.divf %9, %10 : vector<8x1xf32>
    %cst_4 = arith.constant 9.99999974E-6 : f32
    %12 = vector.broadcast %cst_4 : f32 to vector<8x1xf32>
    %13 = arith.addf %11, %12 : vector<8x1xf32>
    %14 = math.rsqrt %13 : vector<8x1xf32>
    %15 = vector.broadcast %14 : vector<8x1xf32> to vector<8x32xf32>
    %16 = arith.mulf %6, %15 : vector<8x32xf32>
    %17 = arith.truncf %16 : vector<8x32xf32> to vector<8x32xbf16>
    %c0_5 = arith.constant 0 : index
    %c0_6 = arith.constant 0 : index
    %18 = vector.load %arg2[%c0_5, %c0_6] : memref<32x32xbf16, #tpu.memory_space<vmem>>, vector<32x32xbf16>
    %cst_7 = arith.constant dense<0.000000e+00> : vector<8x32xf32>
    %19 = tpu.matmul %17, %18, %cst_7 {dimension_numbers = #tpu.dot_dimension_numbers<[1], [0], [0], [1], [0, 0, 1, 1], [], []>} : vector<8x32xbf16>, vector<32x32xbf16>, vector<8x32xf32> -> vector<8x32xf32>
    %c0_8 = arith.constant 0 : index
    %c0_9 = arith.constant 0 : index
    %20 = vector.load %arg3[%c0_8, %c0_9] : memref<1x32xf32, #tpu.memory_space<vmem>>, vector<1x32xf32>
    %21 = vector.broadcast %20 : vector<1x32xf32> to vector<8x32xf32>
    %22 = arith.addf %19, %21 : vector<8x32xf32>
    %c0_10 = arith.constant 0 : index
    %c0_11 = arith.constant 0 : index
    %23 = vector.load %arg4[%c0_10, %c0_11] : memref<8x32xf32, #tpu.memory_space<vmem>>, vector<8x32xf32>
    tpu.vector_store %arg4[%c0_10, %c0_11], %22 {strides = array<i32>} : memref<8x32xf32, #tpu.memory_space<vmem>>, vector<8x32xf32>,
    return
  }
  func.func @transform_0(%arg0: i32) -> (i32, i32) {
    %c0_i32 = arith.constant 0 : i32
    %c0_i32_0 = arith.constant 0 : i32
    return %arg0, %c0_i32 : i32, i32
  }
  func.func @transform_1(%arg0: i32) -> (i32, i32) {
    %c0_i32 = arith.constant 0 : i32
    %c0_i32_0 = arith.constant 0 : i32
    %c0_i32_1 = arith.constant 0 : i32
    return %c0_i32, %c0_i32_0 : i32, i32
  }
  func.func @transform_2(%arg0: i32) -> (i32, i32) {
    %c0_i32 = arith.constant 0 : i32
    %c0_i32_0 = arith.constant 0 : i32
    %c0_i32_1 = arith.constant 0 : i32
    return %c0_i32, %c0_i32_0 : i32, i32
  }
  func.func @transform_3(%arg0: i32) -> (i32, i32) {
    %c0_i32 = arith.constant 0 : i32
    %c0_i32_0 = arith.constant 0 : i32
    return %arg0, %c0_i32 : i32, i32
  }
}

</mosaic_0001>

<llo_original>
// kernel: tpu_custom_call.1
$region0: #{tpu_custom_call.1}
  #allocation0 [shape = 'u32[]', space=smem, size = 0x4, offset = 0x4, fixed_abs, tag = 'smem constant byte address 0x4 - core index']
  #allocation1 [shape = 'u32[144,128]{1,0:T(1,128)}', space=vmem, size = 0x12000, scoped, tag = 'internal scratch']
  %s0 = inlined_call_operand.hbm [shape: f32[16,32], index: 0, kind: input, shape index: {}]
  %s1 = inlined_call_operand.hbm [shape: bf16[32,32], index: 1, kind: input, shape index: {}]
  %s2 = inlined_call_operand.vmem [shape: f32[1,32], index: 2, kind: input, shape index: {}]
  %s3 = inlined_call_operand.hbm [shape: f32[16,32], index: 3, kind: output, shape index: {}]
  %s4 = sld [smem:[#allocation0]]
  $region53: #{tpu_custom_call.1} parent=0
    _
  %s6 = ssub.s32 1, %s4
  %s7 = scalar_select 0, %s6, %s4
  $region1: #{tpu_custom_call.1} parent=0
    #allocation2 [shape = 'u8[8192]{0}', space=vmem, size = 0x2000, scoped, tag = 'input window, operand 0']
    #allocation3 [shape = 's32[2]{0}', space=sflag, size = 0x8, scoped, tag = 'scoped memory for tpu_custom_call.1']
    #allocation4 [shape = 's32[2]{0}', space=sflag, size = 0x8, scoped, tag = 'scoped memory for tpu_custom_call.1']
    #allocation5 [shape = 'u8[8192]{0}', space=vmem, size = 0x2000, scoped, tag = 'input window, operand 1, single buffered']
    #allocation6 [shape = 's32[1]{0}', space=sflag, size = 0x4, scoped, tag = 'scoped memory for tpu_custom_call.1']
    #allocation7 [shape = 'u8[8192]{0}', space=vmem, size = 0x2000, scoped, tag = 'output window, operand 0']
    %8 = vsyncpa [#allocation3], 0
    %s9 = scalar_lea.sflag [#allocation3], 1
    %10 = vsyncpa %s9, 0
    %11 = vsyncpa [#allocation6], 0
    %12 = vsyncpa [#allocation4], 0
    %s13 = scalar_lea.sflag [#allocation4], 1
    %14 = vsyncpa %s13, 0
    loop: start=0, step=1, limit=4
    $region2: #{tpu_custom_call.1} parent=1 // loop_pre_header
      _
    $region3: #{tpu_custom_call.1} parent=1 // loop_header
      %s16 = sphi 0, %s20
      %p17 = scmp.ge.s32.totalorder %s16, 4
      %s26 = sphi 0, %s28
      %s29 = sphi 0, %s26
      %s30 = sphi 0, %s29
      %s46 = sphi 0, %s30
      %s50 = sphi 0, %s50
      %s52 = sphi 0, %s50
      %s53 = sphi 0, %s52
      %s67 = sphi 0, %s53
      %s71 = sphi 0, %s71
      %s73 = sphi 0, %s71
      %s74 = sphi 0, %s73
      %s88 = sphi 0, %s74
      %s94 = sphi 0, %s96
      %s97 = sphi 0, %s94
      %s98 = sphi 0, %s97
      %s114 = sphi 0, %s98
    $region4: #{tpu_custom_call.1} parent=1 // loop_header_branch
      %19 = sbr.rel (%p17) target = $region8
    $region5: #{tpu_custom_call.1} parent=1 // loop_body
      %s21 = ssub.s32 %s16, 1
      %s22 = ssub.s32 %s16, 2
      %s23 = sadd.s32 %s16, 1
      %s24 = ssub.s32 %s16, %s23
      %p25 = scmp.eq.s32.totalorder %s24, 0
      %s27 = sadd.s32 %s26, 1
      %s28 = scalar_select %p25, %s26, %s27
      %p31 = pneg %p25
      %p32 = scmp.eq.s32.totalorder %s16, 1
      %p33 = por %p31, %p32
      %p34 = scmp.ne.s32.totalorder %s26, %s29
      %p35 = scmp.eq.s32.totalorder %s16, 0
      %p36 = por %p34, %p35
      %p37 = scmp.ne.s32.totalorder %s26, %s29
      %p38 = scmp.eq.s32.totalorder %s21, 1
      %p39 = por %p37, %p38
      %p40 = scmp.ne.s32.totalorder %s29, %s30
      %p41 = scmp.eq.s32.totalorder %s21, 0
      %p42 = por %p40, %p41
      %p43 = scmp.ne.s32.totalorder %s29, %s30
      %p44 = scmp.eq.s32.totalorder %s22, 1
      %p45 = por %p43, %p44
      %p47 = scmp.ne.s32.totalorder %s30, %s46
      %p48 = scmp.eq.s32.totalorder %s22, 0
      %p49 = por %p47, %p48
      %s51 = sadd.s32 %s50, 1
      %p54 = scmp.eq.s32.totalorder %s16, 1
      %p55 = scmp.ne.s32.totalorder %s50, %s52
      %p56 = scmp.eq.s32.totalorder %s16, 0
      %p57 = por %p55, %p56
      %p58 = scmp.ne.s32.totalorder %s50, %s52
      %p59 = scmp.eq.s32.totalorder %s21, 1
      %p60 = por %p58, %p59
      %p61 = scmp.ne.s32.totalorder %s52, %s53
      %p62 = scmp.eq.s32.totalorder %s21, 0
      %p63 = por %p61, %p62
      %p64 = scmp.ne.s32.totalorder %s52, %s53
      %p65 = scmp.eq.s32.totalorder %s22, 1
      %p66 = por %p64, %p65
      %p68 = scmp.ne.s32.totalorder %s53, %s67
      %p69 = scmp.eq.s32.totalorder %s22, 0
      %p70 = por %p68, %p69
      %s72 = sadd.s32 %s71, 1
      %p75 = scmp.eq.s32.totalorder %s16, 1
      %p76 = scmp.ne.s32.totalorder %s71, %s73
      %p77 = scmp.eq.s32.totalorder %s16, 0
      %p78 = por %p76, %p77
      %p79 = scmp.ne.s32.totalorder %s71, %s73
      %p80 = scmp.eq.s32.totalorder %s21, 1
      %p81 = por %p79, %p80
      %p82 = scmp.ne.s32.totalorder %s73, %s74
      %p83 = scmp.eq.s32.totalorder %s21, 0
      %p84 = por %p82, %p83
      %p85 = scmp.ne.s32.totalorder %s73, %s74
      %p86 = scmp.eq.s32.totalorder %s22, 1
      %p87 = por %p85, %p86
      %p89 = scmp.ne.s32.totalorder %s74, %s88
      %p90 = scmp.eq.s32.totalorder %s22, 0
      %p91 = por %p89, %p90
      %s92 = ssub.s32 %s16, %s23
      %p93 = scmp.eq.s32.totalorder %s92, 0
      %s95 = sadd.s32 %s94, 1
      %s96 = scalar_select %p93, %s94, %s95
      %p99 = pneg %p93
      %p100 = scmp.eq.s32.totalorder %s16, 1
      %p101 = por %p99, %p100
      %p102 = scmp.ne.s32.totalorder %s94, %s97
      %p103 = scmp.eq.s32.totalorder %s16, 0
      %p104 = por %p102, %p103
      %p105 = scmp.ne.s32.totalorder %s94, %s97
      %p106 = scmp.eq.s32.totalorder %s21, 1
      %p107 = por %p105, %p106
      %p108 = scmp.ne.s32.totalorder %s97, %s98
      %p109 = scmp.eq.s32.totalorder %s21, 0
      %p110 = por %p108, %p109
      %p111 = scmp.ne.s32.totalorder %s97, %s98
      %p112 = scmp.eq.s32.totalorder %s22, 1
      %p113 = por %p111, %p112
      %p115 = scmp.ne.s32.totalorder %s98, %s114
      %p116 = scmp.eq.s32.totalorder %s22, 0
      %p117 = por %p115, %p116
      %p118 = scmp.le.s32.totalorder 1, %s16
      %p119 = scmp.lt.s32.totalorder %s16, 3
      %p120 = pnand %p118, %p119
      %p121 = pneg %p120
      // Predicated region
      $region9: #{tpu_custom_call.1} parent=5 // pred_check
        _
      $region10: #{tpu_custom_call.1} parent=5 // pred_check_branch
        %123 = sbr.rel (%p120) target = $region12
      $region11: #{tpu_custom_call.1} parent=5 // pred_region
        %s124 = ssub.s32 %s16, 1
        // Predicated region
        $region13: #{tpu_custom_call.1} parent=11 // pred_check
          %p125 = pneg %p63
        $region14: #{tpu_custom_call.1} parent=11 // pred_check_branch
          %127 = sbr.rel (%p125) target = $region16
        $region15: #{tpu_custom_call.1} parent=11 // pred_region
          %s129 = ssub.s32 256, 256
          %130 = vsyncadd [#allocation6], %s129
          %s131 = sshll.u32 [#allocation5], 4
          %s132 = int_to_ptr.vmem [resolvable:$true] %s131
          %137 = dma.hbm_to_vmem [thread:$0]  %s1, 256, %s132, [#allocation6], 64, 64, 4
        $region16: #{tpu_custom_call.1} parent=11 // pred_fallthru
          _
        // Predicated region
        $region17: #{tpu_custom_call.1} parent=11 // pred_check
          %p138 = pneg %p84
        $region18: #{tpu_custom_call.1} parent=11 // pred_check_branch
          %140 = sbr.rel (%p138) target = $region20
        $region19: #{tpu_custom_call.1} parent=11 // pred_region
          _
        $region20: #{tpu_custom_call.1} parent=11 // pred_fallthru
          _
      $region12: #{tpu_custom_call.1} parent=5 // pred_fallthru
        _
      %p141 = scmp.lt.s32.totalorder %s16, 2
      // Predicated region
      $region21: #{tpu_custom_call.1} parent=5 // pred_check
        %p142 = pneg %p141
      $region22: #{tpu_custom_call.1} parent=5 // pred_check_branch
        %144 = sbr.rel (%p142) target = $region24
      $region23: #{tpu_custom_call.1} parent=5 // pred_region
        // Predicated region
        $region25: #{tpu_custom_call.1} parent=23 // pred_check
          %p145 = pneg %p36
        $region26: #{tpu_custom_call.1} parent=23 // pred_check_branch
          %147 = sbr.rel (%p145) target = $region28
        $region27: #{tpu_custom_call.1} parent=23 // pred_region
          %s148 = sand.u32 %s26, 1
          %s149 = scalar_lea.sflag [#allocation3], %s148
          %s150 = sand.u32 %s26, 1
          %s151 = smul.addr %s150, 8
          %s152 = scalar_lea.vmem [#allocation2], %s151
          %s154 = ssub.s32 128, 128
          %155 = vsyncadd %s149, %s154
          %s156 = smul.addr %s16, 128
          %s157 = scalar_lea.hbm %s0, %s156
          %s159 = sshll.u32 %s152, 4
          %s160 = int_to_ptr.vmem [resolvable:$true] %s159
          %162 = dma.hbm_to_vmem [thread:$0]  %s157, 128, %s160, %s149
        $region28: #{tpu_custom_call.1} parent=23 // pred_fallthru
          _
      $region24: #{tpu_custom_call.1} parent=5 // pred_fallthru
        _
      %p163 = scmp.le.s32.totalorder 1, %s16
      %p164 = scmp.lt.s32.totalorder %s16, 3
      %p165 = pnand %p163, %p164
      %p166 = pneg %p165
      // Predicated region
      $region29: #{tpu_custom_call.1} parent=5 // pred_check
        _
      $region30: #{tpu_custom_call.1} parent=5 // pred_check_branch
        %168 = sbr.rel (%p165) target = $region32
      $region31: #{tpu_custom_call.1} parent=5 // pred_region
        %s169 = ssub.s32 %s16, 1
        %s170 = sand.u32 %s29, 1
        %s171 = scalar_lea.sflag [#allocation3], %s170
        %s172 = sand.u32 %s29, 1
        %s173 = smul.addr %s172, 8
        %s174 = scalar_lea.vmem [#allocation2], %s173
        // Predicated region
        $region33: #{tpu_custom_call.1} parent=31 // pred_check
          %p175 = pneg %p42
        $region34: #{tpu_custom_call.1} parent=31 // pred_check_branch
          %177 = sbr.rel (%p175) target = $region36
        $region35: #{tpu_custom_call.1} parent=31 // pred_region
          %178 = dma.done %s171, 128
        $region36: #{tpu_custom_call.1} parent=31 // pred_fallthru
          _
        // Predicated region
        $region37: #{tpu_custom_call.1} parent=31 // pred_check
          %p179 = pneg %p63
        $region38: #{tpu_custom_call.1} parent=31 // pred_check_branch
          %181 = sbr.rel (%p179) target = $region40
        $region39: #{tpu_custom_call.1} parent=31 // pred_region
          %182 = dma.done [#allocation6], 256
        $region40: #{tpu_custom_call.1} parent=31 // pred_fallthru
          _
        %s183 = sand.u32 %s29, 1
        %s184 = scalar_lea.sflag [#allocation3], %s183
        %s185 = sand.u32 %s29, 1
        %s186 = smul.addr %s185, 8
        %s187 = scalar_lea.vmem [#allocation2], %s186
        %p188 = pneg %p42
        %p189 = pneg %p39
        %p190 = pneg %p63
        %p191 = pneg %p60
        %p192 = pneg %p84
        %p193 = pneg %p81
        %p194 = pneg %p110
        %p195 = pneg %p107
        %s196 = sand.u32 %s97, 1
        %s197 = scalar_lea.sflag [#allocation4], %s196
        %s198 = sand.u32 %s97, 1
        %s199 = smul.addr %s198, 8
        %s200 = scalar_lea.vmem [#allocation7], %s199
        %v202 = vld [vmem:[%s174] sm:$0xff]
        %vm203 = vcmask 261120
        %v204 = vsel %vm203, %v202, 0.0
        %205 = vadd.xlane.f32.xlu0 %v204
        %v206 = vpop.xlane.xlu0 %205
        %v207 = vrcp.pop 32.0
        %v208 = vmul.f32 %v206, %v207
        %v209 = vsub.f32 %v202, %v208
        %v210 = vmul.f32 %v209, %v209
        %v211 = vsel %vm203, %v210, 0.0
        %212 = vadd.xlane.f32.xlu0 %v211
        %v213 = vpop.xlane.xlu0 %212
        %v214 = vmul.f32 %v213, %v207
        %v215 = vadd.f32 %v214, 1e-05
        %v216 = vrsqrt.pop %v215
        %v217 = vmul.f32 %v209, %v216
        %v218 = vpack.c.bf16 %v217, %v217
        %v219 = vld [vmem:[#allocation5] sm:$0xf]
        %v220 = vld [vmem:[#allocation5 + $0x4] sm:$0xf]
        %v221 = vld [vmem:[#allocation5 + $0x8] sm:$0xf]
        %v222 = vld [vmem:[#allocation5 + $0xc] sm:$0xf]
        %v223 = vld [vmem:[%s2] sm:$0x1]
        %v225 = vlaneseq
        %v226 = vshrl.u32 %v225, 7
        %v227 = vsub.s32 0, %v226
        %v228 = vrot.slane %v223, %v227
        %v234 = vunpack.c.l.b16 %v219
        %v235 = vunpack.c.l.b16 %v220
        %v236 = vunpack.c.l.b16 %v221
        %v237 = vunpack.c.l.b16 %v222
        %v238 = vpack.c.b16 %v235, %v234
        %v239 = vpack.c.b16 %v237, %v236
        %v243 = vsel %vm203, %v218, 0
        %245 = vmatprep.subr.bf16.mxu0 0
        %246 = vmatpush1.bf16.msra.mxu0 %v238
        %247 = vmatprep.subr.bf16.mxu0 0
        %248 = vmatpush1.bf16.msra.mxu0 %v239
        %249 = vmatprep.subr.bf16.mxu0 0
        %250 = vmatpush1.bf16.msra.mxu0 0
        %251 = vmatprep.subr.bf16.mxu0 0
        %252 = vmatpush1.bf16.msra.mxu0 0
        %253 = vmatprep.subr.bf16.mxu0 0
        %254 = vmatpush1.bf16.msra.mxu0 0
        %255 = vmatprep.subr.bf16.mxu0 0
        %256 = vmatpush1.bf16.msra.mxu0 0
        %257 = vmatprep.subr.bf16.mxu0 0
        %258 = vmatpush1.bf16.msra.mxu0 0
        %259 = vmatprep.subr.bf16.mxu0 0
        %260 = vmatpush1.bf16.msra.mxu0 0
        %261 = vmatprep.subr.bf16.mxu0 0
        %262 = vmatpush1.bf16.msra.mxu0 0
        %263 = vmatprep.subr.bf16.mxu0 0
        %264 = vmatpush1.bf16.msra.mxu0 0
        %265 = vmatprep.subr.bf16.mxu0 0
        %266 = vmatpush1.bf16.msra.mxu0 0
        %267 = vmatprep.subr.bf16.mxu0 0
        %268 = vmatpush1.bf16.msra.mxu0 0
        %269 = vmatprep.subr.bf16.mxu0 0
        %270 = vmatpush1.bf16.msra.mxu0 0
        %271 = vmatprep.subr.bf16.mxu0 0
        %272 = vmatpush1.bf16.msra.mxu0 0
        %273 = vmatprep.subr.bf16.mxu0 0
        %274 = vmatpush1.bf16.msra.mxu0 0
        %275 = vmatprep.subr.bf16.mxu0 0
        %276 = vmatpush1.bf16.msra.mxu0 0
        %277 = vmatprep.mubr.bf16.mxu0 0
        %278 = vmatmul.mubr.bf16.gmra.mrb[0].mxu0 %v243
        %v279 = vpop.f32.mrb[0].mxu0
        %v280 = vadd.f32 %v228, %v279
        %v281 = vpop.f32.mrb[0].mxu0
        %v282 = vpop.f32.mrb[0].mxu0
        %v283 = vpop.f32.mrb[0].mxu0
        %284 = vdwg.mxu0
        %285 = vst.msk [vmem:[%s200] sm:$0xff] %vm203, %v280
        %s286 = sand.u32 %s97, 1
        %s287 = scalar_lea.sflag [#allocation4], %s286
        %s288 = sand.u32 %s97, 1
        %s289 = smul.addr %s288, 8
        %s290 = scalar_lea.vmem [#allocation7], %s289
        // Predicated region
        $region41: #{tpu_custom_call.1} parent=31 // pred_check
          %p291 = pneg %p107
        $region42: #{tpu_custom_call.1} parent=31 // pred_check_branch
          %293 = sbr.rel (%p291) target = $region44
        $region43: #{tpu_custom_call.1} parent=31 // pred_region
          %s295 = ssub.s32 128, 128
          %296 = vsyncadd %s287, %s295
          %s297 = smul.addr %s21, 128
          %s298 = scalar_lea.hbm %s3, %s297
          %s300 = sshll.u32 %s290, 4
          %s301 = int_to_ptr.vmem [resolvable:$true] %s300
          %303 = dma.vmem_to_hbm [thread:$0]  %s301, 128, %s298, %s287
        $region44: #{tpu_custom_call.1} parent=31 // pred_fallthru
          _
      $region32: #{tpu_custom_call.1} parent=5 // pred_fallthru
        _
      %p304 = scmp.le.s32.totalorder 2, %s16
      // Predicated region
      $region45: #{tpu_custom_call.1} parent=5 // pred_check
        %p305 = pneg %p304
      $region46: #{tpu_custom_call.1} parent=5 // pred_check_branch
        %307 = sbr.rel (%p305) target = $region48
      $region47: #{tpu_custom_call.1} parent=5 // pred_region
        %s308 = ssub.s32 %s16, 2
        // Predicated region
        $region49: #{tpu_custom_call.1} parent=47 // pred_check
          %p309 = pneg %p113
        $region50: #{tpu_custom_call.1} parent=47 // pred_check_branch
          %311 = sbr.rel (%p309) target = $region52
        $region51: #{tpu_custom_call.1} parent=47 // pred_region
          %s312 = sand.u32 %s98, 1
          %s313 = scalar_lea.sflag [#allocation4], %s312
          %s314 = sand.u32 %s98, 1
          %s315 = smul.addr %s314, 8
          %s316 = scalar_lea.vmem [#allocation7], %s315
          %317 = dma.done %s313, 128
        $region52: #{tpu_custom_call.1} parent=47 // pred_fallthru
          _
      $region48: #{tpu_custom_call.1} parent=5 // pred_fallthru
        _
    $region6: #{tpu_custom_call.1} parent=1 // loop_footer
      %s20 = sadd.s32 1, %s16
    $region7: #{tpu_custom_call.1} parent=1 // loop_footer_branch
      %15 = sbr.rel target = $region3
    $region8: #{tpu_custom_call.1} parent=1 // loop_exit
      _
    %318 = vsyncpa [#allocation3], 1
    %s319 = scalar_lea.sflag [#allocation3], 1
    %320 = vsyncpa %s319, 1
    %321 = vsyncpa [#allocation6], 1
    %322 = vsyncpa [#allocation4], 1
    %s323 = scalar_lea.sflag [#allocation4], 1
    %324 = vsyncpa %s323, 1

</llo_original>
